<compile_context>
chip_gen: v5e
topology: v5e:2x2
jax: 0.10.0
libtpu: 0.0.40
codegen_flags: <defaults>
</compile_context>

<pallas_src>
import functools

import jax
import jax.numpy as jnp
from jax import lax
from jax.experimental import pallas as pl
from jax.experimental.pallas import tpu as pltpu

_LANE = 128
_SUB = 8
_TARGET_BLOCK_BYTES = 2 * 1024 * 1024   # ~2 MiB per block (f32: 4096 x 128)
_VMEM_LIMIT_BYTES = 32 * 1024 * 1024    # safe on v5e / v6e / v7x


def _bits_to_rayleigh_mag(bits, bitcast):
    """uint32 random bits -> Rayleigh(scale=1/sqrt(2)) magnitude (float32)."""
    ubits = bits if bits.dtype == jnp.uint32 else bitcast(bits, jnp.uint32)
    # 23 random mantissa bits -> f in [1, 2 - 2^-23] -> v = 2 - f in [2^-23, 1].
    mant = ubits >> jnp.uint32(9)
    fbits = mant | jnp.uint32(0x3F800000)
    v = 2.0 - bitcast(fbits, jnp.float32)
    # Rayleigh inverse CDF; v > 0 so log is finite. log/sqrt ride the EUP slot,
    # which is otherwise idle in this mem-bound kernel (f32 I/O).
    return jnp.sqrt(-jnp.log(v))


def _rayleigh_kernel_hwprng(seed_ref, x_ref, o_ref, *, sigma):
    # Unique, deterministic PRNG stream per grid tile.
    pltpu.prng_seed(seed_ref[0], pl.program_id(0))
    bits = pltpu.prng_random_bits(x_ref.shape)
    mag = _bits_to_rayleigh_mag(bits, pltpu.bitcast)
    x = x_ref[...].astype(jnp.float32)
    o_ref[...] = (x + sigma * mag).astype(o_ref.dtype)


def _rayleigh_kernel_hostbits(x_ref, bits_ref, o_ref, *, sigma):
    # Portable fallback: random bits are a regular streamed input.
    mag = _bits_to_rayleigh_mag(bits_ref[...], lax.bitcast_convert_type)
    x = x_ref[...].astype(jnp.float32)
    o_ref[...] = (x + sigma * mag).astype(o_ref.dtype)


def _pick_tile_rows(rows, itemsize):
    cap = max(_SUB, (_TARGET_BLOCK_BYTES // (_LANE * itemsize)) // _SUB * _SUB)
    if rows > cap:
        return cap                       # grid automatically has >= 2 steps
    if rows >= 2 * _SUB:
        # Split a single-step grid so both TensorCores get work on v7x
        # (one extra ~0.35us grid step is negligible on single-TC v5e/v6e).
        half = -(-rows // 2)
        return -(-half // _SUB) * _SUB   # multiple of 8 -> valid block shape
    return rows                          # tiny input: one full-array block


def rayleigh_channel(x, sigma, seed=0, donate_x=False):
    """y = x + sigma * Rayleigh(1/sqrt(2)) noise, elementwise (RayleighChannel.forward)."""
    orig_shape = x.shape
    orig_dtype = x.dtype

    flat = x.reshape(-1)
    n = flat.shape[0]
    if n == 0:
        return x

    pad = (-n) % _LANE
    if pad:  # only when not lane-aligned; most shapes skip this entirely
        flat = jnp.pad(flat, (0, pad))
    x2 = flat.reshape(-1, _LANE)
    rows = x2.shape[0]
    itemsize = jnp.dtype(orig_dtype).itemsize

    tile_rows = _pick_tile_rows(rows, itemsize)
    grid = (pl.cdiv(rows, tile_rows),)
    n_eff = rows * _LANE

    compiler_params = pltpu.CompilerParams(
        dimension_semantics=("parallel",),
        vmem_limit_bytes=_VMEM_LIMIT_BYTES,
    )

    use_hw_prng = jax.default_backend() == "tpu"

    if use_hw_prng:
        seed_arr = jnp.atleast_1d(jnp.asarray(seed, dtype=jnp.int32))
        spec = pl.BlockSpec((tile_rows, _LANE), lambda i, seed_ref: (i, 0))
        cost = pl.CostEstimate(
            flops=8 * n_eff,
            transcendentals=2 * n_eff,
            bytes_accessed=2 * n_eff * itemsize,
        )
        out = pl.pallas_call(
            functools.partial(_rayleigh_kernel_hwprng, sigma=float(sigma)),
            out_shape=jax.ShapeDtypeStruct((rows, _LANE), orig_dtype),
            grid_spec=pltpu.PrefetchScalarGridSpec(
                num_scalar_prefetch=1,
                grid=grid,
                in_specs=[spec],
                out_specs=spec,
            ),
            compiler_params=compiler_params,
            cost_estimate=cost,
            input_output_aliases=({1: 0} if donate_x else {}),
        )(seed_arr, x2)
    else:
        # Non-TPU backend (interpret/testing): hardware PRNG unavailable, so
        # pre-generate the uniform bits once and stream them through VMEM.
        key = jax.random.PRNGKey(seed)
        bits = jax.random.bits(key, (rows, _LANE), dtype=jnp.uint32)
        spec = pl.BlockSpec((tile_rows, _LANE), lambda i: (i, 0))
        cost = pl.CostEstimate(
            flops=8 * n_eff,
            transcendentals=2 * n_eff,
            bytes_accessed=2 * n_eff * itemsize + 4 * n_eff,
        )
        out = pl.pallas_call(
            functools.partial(_rayleigh_kernel_hostbits, sigma=float(sigma)),
            out_shape=jax.ShapeDtypeStruct((rows, _LANE), orig_dtype),
            grid=grid,
            in_specs=[spec, spec],
            out_specs=spec,
            compiler_params=compiler_params,
            cost_estimate=cost,
            input_output_aliases=({0: 0} if donate_x else {}),
        )(x2, bits)

    out_flat = out.reshape(-1)
    if pad:
        out_flat = out_flat[:n]
    return out_flat.reshape(orig_shape)


if __name__ == "__main__":
    key = jax.random.PRNGKey(0)

    # Small NCHW input, consistent with the module's "any tensor" forward.
    x = jax.random.normal(key, (2, 4, 16, 16), dtype=jnp.float32)
    sigma = 0.1

    y = rayleigh_channel(x, sigma, seed=42)
    jax.block_until_ready(y)

    # Sanity: shape/dtype preserved; Rayleigh noise is non-negative (y >= x for
    # sigma > 0); mean of noise/sigma matches E[Rayleigh(1/sqrt(2))] = sqrt(pi)/2.
    assert y.shape == x.shape and y.dtype == x.dtype
    noise = (y - x) / sigma
    assert bool(jnp.all(noise >= -1e-5))
    m = float(jnp.mean(noise))
    assert 0.75 < m < 1.0, m

    print("KERNEL_OK")
</pallas_src>

<mosaic_0001>
module attributes {stable_mosaic.version = 11 : i64} {
  func.func @_rayleigh_kernel_hostbits(%arg0: i32, %arg1: memref<8x128xf32, #tpu.memory_space<vmem>>, %arg2: memref<8x128xi32, #tpu.memory_space<vmem>>, %arg3: memref<8x128xf32, #tpu.memory_space<vmem>>) attributes {dimension_semantics = [#tpu.dimension_semantics<parallel>], iteration_bounds = array<i64: 2>, scalar_prefetch = 0 : i64, scratch_operands = 0 : i64, tpu.core_type = #tpu.core_type<tc>, window_params = [{transform_indices = @transform_0, window_bounds = array<i64: 8, 128>}, {transform_indices = @transform_1, window_bounds = array<i64: 8, 128>}, {transform_indices = @transform_2, window_bounds = array<i64: 8, 128>}]} {
    %c0 = arith.constant 0 : index
    %c0_0 = arith.constant 0 : index
    %0 = vector.load %arg2[%c0, %c0_0] : memref<8x128xi32, #tpu.memory_space<vmem>>, vector<8x128xi32>
    %c9_i32 = arith.constant 9 : i32
    %1 = vector.broadcast %c9_i32 : i32 to vector<8x128xi32>
    %2 = arith.shrui %0, %1 : vector<8x128xi32>
    %c1065353216_i32 = arith.constant 1065353216 : i32
    %3 = vector.broadcast %c1065353216_i32 : i32 to vector<8x128xi32>
    %4 = arith.ori %2, %3 : vector<8x128xi32>
    %5 = tpu.bitcast %4 : vector<8x128xi32> -> vector<8x128xf32>
    %cst = arith.constant 2.000000e+00 : f32
    %6 = vector.broadcast %cst : f32 to vector<8x128xf32>
    %7 = arith.subf %6, %5 : vector<8x128xf32>
    %8 = math.log %7 : vector<8x128xf32>
    %cst_1 = arith.constant 0.000000e+00 : f32
    %9 = vector.broadcast %cst_1 : f32 to vector<8x128xf32>
    %10 = arith.subf %9, %8 : vector<8x128xf32>
    %11 = math.sqrt %10 : vector<8x128xf32>
    %c0_2 = arith.constant 0 : index
    %c0_3 = arith.constant 0 : index
    %12 = vector.load %arg1[%c0_2, %c0_3] : memref<8x128xf32, #tpu.memory_space<vmem>>, vector<8x128xf32>
    %cst_4 = arith.constant 1.000000e-01 : f32
    %13 = vector.broadcast %cst_4 : f32 to vector<8x128xf32>
    %14 = arith.mulf %13, %11 : vector<8x128xf32>
    %15 = arith.addf %12, %14 : vector<8x128xf32>
    %c0_5 = arith.constant 0 : index
    %c0_6 = arith.constant 0 : index
    %16 = vector.load %arg3[%c0_5, %c0_6] : memref<8x128xf32, #tpu.memory_space<vmem>>, vector<8x128xf32>
    tpu.vector_store %arg3[%c0_5, %c0_6], %15 {strides = array<i32>} : memref<8x128xf32, #tpu.memory_space<vmem>>, vector<8x128xf32>,
    return
  }
  func.func @transform_0(%arg0: i32) -> (i32, i32) {
    %c0_i32 = arith.constant 0 : i32
    %c0_i32_0 = arith.constant 0 : i32
    return %arg0, %c0_i32 : i32, i32
  }
  func.func @transform_1(%arg0: i32) -> (i32, i32) {
    %c0_i32 = arith.constant 0 : i32
    %c0_i32_0 = arith.constant 0 : i32
    return %arg0, %c0_i32 : i32, i32
  }
  func.func @transform_2(%arg0: i32) -> (i32, i32) {
    %c0_i32 = arith.constant 0 : i32
    %c0_i32_0 = arith.constant 0 : i32
    return %arg0, %c0_i32 : i32, i32
  }
}

</mosaic_0001>

<llo_original>
// kernel: tpu_custom_call.1
$region0: #{tpu_custom_call.1}
  #allocation0 [shape = 'u32[]', space=smem, size = 0x4, offset = 0x4, fixed_abs, tag = 'smem constant byte address 0x4 - core index']
  #allocation1 [shape = 'u32[72,128]{1,0:T(1,128)}', space=vmem, size = 0x9000, scoped, tag = 'internal scratch']
  %s0 = inlined_call_operand.hbm [shape: f32[16,128], index: 0, kind: input, shape index: {}]
  %s1 = inlined_call_operand.hbm [shape: u32[16,128], index: 1, kind: input, shape index: {}]
  %s2 = inlined_call_operand.hbm [shape: f32[16,128], index: 2, kind: output, shape index: {}]
  %s3 = sld [smem:[#allocation0]]
  $region49: #{tpu_custom_call.1} parent=0
    _
  %s5 = ssub.s32 1, %s3
  %s6 = scalar_select 0, %s5, %s3
  $region1: #{tpu_custom_call.1} parent=0
    #allocation2 [shape = 'u8[8192]{0}', space=vmem, size = 0x2000, scoped, tag = 'input window, operand 0']
    #allocation3 [shape = 's32[2]{0}', space=sflag, size = 0x8, scoped, tag = 'scoped memory for tpu_custom_call.1']
    #allocation4 [shape = 's32[2]{0}', space=sflag, size = 0x8, scoped, tag = 'scoped memory for tpu_custom_call.1']
    #allocation5 [shape = 'u8[8192]{0}', space=vmem, size = 0x2000, scoped, tag = 'input window, operand 1']
    #allocation6 [shape = 's32[2]{0}', space=sflag, size = 0x8, scoped, tag = 'scoped memory for tpu_custom_call.1']
    #allocation7 [shape = 'u8[8192]{0}', space=vmem, size = 0x2000, scoped, tag = 'output window, operand 0']
    %7 = vsyncpa [#allocation3], 0
    %s8 = scalar_lea.sflag [#allocation3], 1
    %9 = vsyncpa %s8, 0
    %10 = vsyncpa [#allocation6], 0
    %s11 = scalar_lea.sflag [#allocation6], 1
    %12 = vsyncpa %s11, 0
    %13 = vsyncpa [#allocation4], 0
    %s14 = scalar_lea.sflag [#allocation4], 1
    %15 = vsyncpa %s14, 0
    loop: start=0, step=1, limit=4
    $region2: #{tpu_custom_call.1} parent=1 // loop_pre_header
      _
    $region3: #{tpu_custom_call.1} parent=1 // loop_header
      %s17 = sphi 0, %s21
      %p18 = scmp.ge.s32.totalorder %s17, 4
      %s27 = sphi 0, %s29
      %s30 = sphi 0, %s27
      %s31 = sphi 0, %s30
      %s47 = sphi 0, %s31
      %s53 = sphi 0, %s55
      %s56 = sphi 0, %s53
      %s57 = sphi 0, %s56
      %s73 = sphi 0, %s57
      %s79 = sphi 0, %s81
      %s82 = sphi 0, %s79
      %s83 = sphi 0, %s82
      %s99 = sphi 0, %s83
    $region4: #{tpu_custom_call.1} parent=1 // loop_header_branch
      %20 = sbr.rel (%p18) target = $region8
    $region5: #{tpu_custom_call.1} parent=1 // loop_body
      %s22 = ssub.s32 %s17, 1
      %s23 = ssub.s32 %s17, 2
      %s24 = sadd.s32 %s17, 1
      %s25 = ssub.s32 %s17, %s24
      %p26 = scmp.eq.s32.totalorder %s25, 0
      %s28 = sadd.s32 %s27, 1
      %s29 = scalar_select %p26, %s27, %s28
      %p32 = pneg %p26
      %p33 = scmp.eq.s32.totalorder %s17, 1
      %p34 = por %p32, %p33
      %p35 = scmp.ne.s32.totalorder %s27, %s30
      %p36 = scmp.eq.s32.totalorder %s17, 0
      %p37 = por %p35, %p36
      %p38 = scmp.ne.s32.totalorder %s27, %s30
      %p39 = scmp.eq.s32.totalorder %s22, 1
      %p40 = por %p38, %p39
      %p41 = scmp.ne.s32.totalorder %s30, %s31
      %p42 = scmp.eq.s32.totalorder %s22, 0
      %p43 = por %p41, %p42
      %p44 = scmp.ne.s32.totalorder %s30, %s31
      %p45 = scmp.eq.s32.totalorder %s23, 1
      %p46 = por %p44, %p45
      %p48 = scmp.ne.s32.totalorder %s31, %s47
      %p49 = scmp.eq.s32.totalorder %s23, 0
      %p50 = por %p48, %p49
      %s51 = ssub.s32 %s17, %s24
      %p52 = scmp.eq.s32.totalorder %s51, 0
      %s54 = sadd.s32 %s53, 1
      %s55 = scalar_select %p52, %s53, %s54
      %p58 = pneg %p52
      %p59 = scmp.eq.s32.totalorder %s17, 1
      %p60 = por %p58, %p59
      %p61 = scmp.ne.s32.totalorder %s53, %s56
      %p62 = scmp.eq.s32.totalorder %s17, 0
      %p63 = por %p61, %p62
      %p64 = scmp.ne.s32.totalorder %s53, %s56
      %p65 = scmp.eq.s32.totalorder %s22, 1
      %p66 = por %p64, %p65
      %p67 = scmp.ne.s32.totalorder %s56, %s57
      %p68 = scmp.eq.s32.totalorder %s22, 0
      %p69 = por %p67, %p68
      %p70 = scmp.ne.s32.totalorder %s56, %s57
      %p71 = scmp.eq.s32.totalorder %s23, 1
      %p72 = por %p70, %p71
      %p74 = scmp.ne.s32.totalorder %s57, %s73
      %p75 = scmp.eq.s32.totalorder %s23, 0
      %p76 = por %p74, %p75
      %s77 = ssub.s32 %s17, %s24
      %p78 = scmp.eq.s32.totalorder %s77, 0
      %s80 = sadd.s32 %s79, 1
      %s81 = scalar_select %p78, %s79, %s80
      %p84 = pneg %p78
      %p85 = scmp.eq.s32.totalorder %s17, 1
      %p86 = por %p84, %p85
      %p87 = scmp.ne.s32.totalorder %s79, %s82
      %p88 = scmp.eq.s32.totalorder %s17, 0
      %p89 = por %p87, %p88
      %p90 = scmp.ne.s32.totalorder %s79, %s82
      %p91 = scmp.eq.s32.totalorder %s22, 1
      %p92 = por %p90, %p91
      %p93 = scmp.ne.s32.totalorder %s82, %s83
      %p94 = scmp.eq.s32.totalorder %s22, 0
      %p95 = por %p93, %p94
      %p96 = scmp.ne.s32.totalorder %s82, %s83
      %p97 = scmp.eq.s32.totalorder %s23, 1
      %p98 = por %p96, %p97
      %p100 = scmp.ne.s32.totalorder %s83, %s99
      %p101 = scmp.eq.s32.totalorder %s23, 0
      %p102 = por %p100, %p101
      %p103 = scmp.le.s32.totalorder 1, %s17
      %p104 = scmp.lt.s32.totalorder %s17, 3
      %p105 = pnand %p103, %p104
      %p106 = pneg %p105
      // Predicated region
      $region9: #{tpu_custom_call.1} parent=5 // pred_check
        _
      $region10: #{tpu_custom_call.1} parent=5 // pred_check_branch
        %108 = sbr.rel (%p105) target = $region12
      $region11: #{tpu_custom_call.1} parent=5 // pred_region
        %s109 = ssub.s32 %s17, 1
      $region12: #{tpu_custom_call.1} parent=5 // pred_fallthru
        _
      %p110 = scmp.lt.s32.totalorder %s17, 2
      // Predicated region
      $region13: #{tpu_custom_call.1} parent=5 // pred_check
        %p111 = pneg %p110
      $region14: #{tpu_custom_call.1} parent=5 // pred_check_branch
        %113 = sbr.rel (%p111) target = $region16
      $region15: #{tpu_custom_call.1} parent=5 // pred_region
        // Predicated region
        $region17: #{tpu_custom_call.1} parent=15 // pred_check
          %p114 = pneg %p37
        $region18: #{tpu_custom_call.1} parent=15 // pred_check_branch
          %116 = sbr.rel (%p114) target = $region20
        $region19: #{tpu_custom_call.1} parent=15 // pred_region
          %s117 = sand.u32 %s27, 1
          %s118 = scalar_lea.sflag [#allocation3], %s117
          %s119 = sand.u32 %s27, 1
          %s120 = smul.addr %s119, 8
          %s121 = scalar_lea.vmem [#allocation2], %s120
          %123 = vsyncadd %s118, 0
          %s124 = smul.addr %s17, 8
          %s125 = scalar_lea.hbm %s0, %s124
          %s127 = sshll.u32 %s125, 4
          %s128 = int_to_ptr.hbm [resolvable:$true] %s127
          %s129 = sshll.u32 %s121, 4
          %s130 = int_to_ptr.vmem [resolvable:$true] %s129
          %132 = dma.hbm_to_vmem [thread:$0]  %s128, 128, %s130, %s118
        $region20: #{tpu_custom_call.1} parent=15 // pred_fallthru
          _
        // Predicated region
        $region21: #{tpu_custom_call.1} parent=15 // pred_check
          %p133 = pneg %p63
        $region22: #{tpu_custom_call.1} parent=15 // pred_check_branch
          %135 = sbr.rel (%p133) target = $region24
        $region23: #{tpu_custom_call.1} parent=15 // pred_region
          %s136 = sand.u32 %s53, 1
          %s137 = scalar_lea.sflag [#allocation6], %s136
          %s138 = sand.u32 %s53, 1
          %s139 = smul.addr %s138, 8
          %s140 = scalar_lea.vmem [#allocation5], %s139
          %142 = vsyncadd %s137, 0
          %s143 = smul.addr %s17, 8
          %s144 = scalar_lea.hbm %s1, %s143
          %s146 = sshll.u32 %s144, 4
          %s147 = int_to_ptr.hbm [resolvable:$true] %s146
          %s148 = sshll.u32 %s140, 4
          %s149 = int_to_ptr.vmem [resolvable:$true] %s148
          %151 = dma.hbm_to_vmem [thread:$0]  %s147, 128, %s149, %s137
        $region24: #{tpu_custom_call.1} parent=15 // pred_fallthru
          _
      $region16: #{tpu_custom_call.1} parent=5 // pred_fallthru
        _
      %p152 = scmp.le.s32.totalorder 1, %s17
      %p153 = scmp.lt.s32.totalorder %s17, 3
      %p154 = pnand %p152, %p153
      %p155 = pneg %p154
      // Predicated region
      $region25: #{tpu_custom_call.1} parent=5 // pred_check
        _
      $region26: #{tpu_custom_call.1} parent=5 // pred_check_branch
        %157 = sbr.rel (%p154) target = $region28
      $region27: #{tpu_custom_call.1} parent=5 // pred_region
        %s158 = ssub.s32 %s17, 1
        %s159 = sand.u32 %s30, 1
        %s160 = scalar_lea.sflag [#allocation3], %s159
        %s161 = sand.u32 %s30, 1
        %s162 = smul.addr %s161, 8
        %s163 = scalar_lea.vmem [#allocation2], %s162
        // Predicated region
        $region29: #{tpu_custom_call.1} parent=27 // pred_check
          %p164 = pneg %p43
        $region30: #{tpu_custom_call.1} parent=27 // pred_check_branch
          %166 = sbr.rel (%p164) target = $region32
        $region31: #{tpu_custom_call.1} parent=27 // pred_region
          %168 = dma.done %s160, 128
        $region32: #{tpu_custom_call.1} parent=27 // pred_fallthru
          _
        %s169 = sand.u32 %s56, 1
        %s170 = scalar_lea.sflag [#allocation6], %s169
        %s171 = sand.u32 %s56, 1
        %s172 = smul.addr %s171, 8
        %s173 = scalar_lea.vmem [#allocation5], %s172
        // Predicated region
        $region33: #{tpu_custom_call.1} parent=27 // pred_check
          %p174 = pneg %p69
        $region34: #{tpu_custom_call.1} parent=27 // pred_check_branch
          %176 = sbr.rel (%p174) target = $region36
        $region35: #{tpu_custom_call.1} parent=27 // pred_region
          %178 = dma.done %s170, 128
        $region36: #{tpu_custom_call.1} parent=27 // pred_fallthru
          _
        %s179 = sand.u32 %s30, 1
        %s180 = scalar_lea.sflag [#allocation3], %s179
        %s181 = sand.u32 %s30, 1
        %s182 = smul.addr %s181, 8
        %s183 = scalar_lea.vmem [#allocation2], %s182
        %p184 = pneg %p43
        %p185 = pneg %p40
        %s186 = sand.u32 %s56, 1
        %s187 = scalar_lea.sflag [#allocation6], %s186
        %s188 = sand.u32 %s56, 1
        %s189 = smul.addr %s188, 8
        %s190 = scalar_lea.vmem [#allocation5], %s189
        %p191 = pneg %p69
        %p192 = pneg %p66
        %p193 = pneg %p95
        %p194 = pneg %p92
        %s195 = sand.u32 %s82, 1
        %s196 = scalar_lea.sflag [#allocation4], %s195
        %s197 = sand.u32 %s82, 1
        %s198 = smul.addr %s197, 8
        %s199 = scalar_lea.vmem [#allocation7], %s198
        %v200 = vld [vmem:[%s173] sm:$0xff]
        %v201 = vshrl.u32 %v200, 9
        %v202 = vor.u32 %v201, 1065353216
        %v204 = vsub.f32 2.0, %v202
        %v205 = vlog2.pop %v204
        %v206 = vmul.f32 %v205, 0.6931472
        %v207 = vsub.f32 0.0, %v206
        %v208 = vrsqrt.pop %v207
        %v209 = vmul.f32 %v208, %v207
        %v210 = vmul.f32 %v209, %v208
        %v211 = vmul.f32 0.5, %v210
        %v212 = vsub.f32 1.5, %v211
        %v213 = vmul.f32 %v208, %v212
        %v214 = vmul.f32 %v207, %v213
        %vm215 = vcmp.eq.f32.partialorder %v207, inf
        %v216 = vsel %vm215, %v207, %v214
        %vm217 = vcmp.eq.f32.partialorder %v207, 0.0
        %v218 = vand.u32 %v207, 2147483648
        %v219 = vsel %vm217, %v218, %v216
        %v220 = vld [vmem:[%s163] sm:$0xff]
        %v221 = vmul.f32 %v219, 0.1
        %v222 = vadd.f32 %v220, %v221
        %223 = vst [vmem:[%s199] sm:$0xff] %v222
        %s224 = sand.u32 %s82, 1
        %s225 = scalar_lea.sflag [#allocation4], %s224
        %s226 = sand.u32 %s82, 1
        %s227 = smul.addr %s226, 8
        %s228 = scalar_lea.vmem [#allocation7], %s227
        // Predicated region
        $region37: #{tpu_custom_call.1} parent=27 // pred_check
          %p229 = pneg %p92
        $region38: #{tpu_custom_call.1} parent=27 // pred_check_branch
          %231 = sbr.rel (%p229) target = $region40
        $region39: #{tpu_custom_call.1} parent=27 // pred_region
          %233 = vsyncadd %s225, 0
          %s234 = smul.addr %s22, 8
          %s235 = scalar_lea.hbm %s2, %s234
          %s237 = sshll.u32 %s228, 4
          %s238 = int_to_ptr.vmem [resolvable:$true] %s237
          %s239 = sshll.u32 %s235, 4
          %s240 = int_to_ptr.hbm [resolvable:$true] %s239
          %242 = dma.vmem_to_hbm [thread:$0]  %s238, 128, %s240, %s225
        $region40: #{tpu_custom_call.1} parent=27 // pred_fallthru
          _
      $region28: #{tpu_custom_call.1} parent=5 // pred_fallthru
        _
      %p243 = scmp.le.s32.totalorder 2, %s17
      // Predicated region
      $region41: #{tpu_custom_call.1} parent=5 // pred_check
        %p244 = pneg %p243
      $region42: #{tpu_custom_call.1} parent=5 // pred_check_branch
        %246 = sbr.rel (%p244) target = $region44
      $region43: #{tpu_custom_call.1} parent=5 // pred_region
        %s247 = ssub.s32 %s17, 2
        // Predicated region
        $region45: #{tpu_custom_call.1} parent=43 // pred_check
          %p248 = pneg %p98
        $region46: #{tpu_custom_call.1} parent=43 // pred_check_branch
          %250 = sbr.rel (%p248) target = $region48
        $region47: #{tpu_custom_call.1} parent=43 // pred_region
          %s251 = sand.u32 %s83, 1
          %s252 = scalar_lea.sflag [#allocation4], %s251
          %s253 = sand.u32 %s83, 1
          %s254 = smul.addr %s253, 8
          %s255 = scalar_lea.vmem [#allocation7], %s254
          %257 = dma.done %s252, 128
        $region48: #{tpu_custom_call.1} parent=43 // pred_fallthru
          _
      $region44: #{tpu_custom_call.1} parent=5 // pred_fallthru
        _
    $region6: #{tpu_custom_call.1} parent=1 // loop_footer
      %s21 = sadd.s32 1, %s17
    $region7: #{tpu_custom_call.1} parent=1 // loop_footer_branch
      %16 = sbr.rel target = $region3
    $region8: #{tpu_custom_call.1} parent=1 // loop_exit
      _
    %258 = vsyncpa [#allocation3], 1
    %s259 = scalar_lea.sflag [#allocation3], 1
    %260 = vsyncpa %s259, 1
    %261 = vsyncpa [#allocation6], 1
    %s262 = scalar_lea.sflag [#allocation6], 1
    %263 = vsyncpa %s262, 1
    %264 = vsyncpa [#allocation4], 1
    %s265 = scalar_lea.sflag [#allocation4], 1
    %266 = vsyncpa %s265, 1

</llo_original>
